<compile_context>
chip_gen: v7x
topology: tpu7x:2x2x1
jax: 0.10.0
libtpu: 0.0.40
codegen_flags: <defaults>
</compile_context>

<pallas_src>
import jax
import jax.numpy as jnp
from jax import lax
from jax.experimental import pallas as pl
from jax.experimental.pallas import tpu as pltpu


def topicnet3_kernel(x_ref, wt_ref, o_ref):
    # x_ref:  (N, D_in)   full input in VMEM
    # wt_ref: (D_in, H)   pre-transposed weight in VMEM (transposed once at init)
    # o_ref:  (1, H)      full output row (lane-dense store)
    #
    # h[n, h] = sum_d x[n, d] * wt[d, h]  — contraction on RHS dim 0: no
    # in-kernel XLU transpose, straight to the MXU.
    h = lax.dot_general(
        x_ref[...],
        wt_ref[...],
        dimension_numbers=(((1,), (0,)), ((), ())),
        preferred_element_type=jnp.float32,
    )  # (N, H) f32
    # max over dim 0 (rows / batch), keepdim, then clamp(min=0)
    y = jnp.max(h, axis=0, keepdims=True)
    o_ref[...] = jnp.maximum(y, 0.0).astype(o_ref.dtype)


def prepare_params(w_in):
    """One-time parameter prep: PyTorch Linear stores W as (H, D_in); transpose
    once here (outside the kernel / per-call path) to the MXU-friendly
    (D_in, H) layout."""
    return jnp.asarray(w_in).T  # (D_in, H)


def topicnet3_forward(x, w_in_t):
    """x: (N, D_in) f32; w_in_t: (D_in, H) f32 (pre-transposed via prepare_params)."""
    N, D_in = x.shape
    D_in_w, H = w_in_t.shape
    assert D_in_w == D_in

    cost = pl.CostEstimate(
        flops=2 * N * D_in * H,
        transcendentals=0,
        bytes_accessed=(N * D_in + D_in * H + H) * 4,
    )

    return pl.pallas_call(
        topicnet3_kernel,
        out_shape=jax.ShapeDtypeStruct((1, H), jnp.float32),
        # No grid: whole problem in one invocation, all operands resident in
        # VMEM (~133 KiB) — no per-step pipeline overhead, no double-buffering.
        in_specs=[
            pl.BlockSpec(memory_space=pltpu.MemorySpace.VMEM),  # x
            pl.BlockSpec(memory_space=pltpu.MemorySpace.VMEM),  # w_in_t (D_in, H)
        ],
        out_specs=pl.BlockSpec(memory_space=pltpu.MemorySpace.VMEM),
        cost_estimate=cost,
    )(x, w_in_t)


def topicnet3_reference(x, w_in):
    # Reference in PyTorch layout: h = x @ W^T; max over dim 0; clamp(min=0).
    h = x @ w_in.T
    return jnp.maximum(jnp.max(h, axis=0, keepdims=True), 0.0)


if __name__ == "__main__":
    # Small shapes consistent with forward: x is (N, D_in), output is (1, H).
    N, D_in, H, D_out = 8, 128, 256, 128

    key = jax.random.PRNGKey(0)
    kx, kw1, kw2, kb2 = jax.random.split(key, 4)

    x = jax.random.normal(kx, (N, D_in), dtype=jnp.float32)

    # Deterministic parameter init (shapes match torch.nn.Linear in __init__).
    w_in = jax.random.normal(kw1, (H, D_in), dtype=jnp.float32) * 0.05   # Linear(D_in, H, bias=False)
    w_out = jax.random.normal(kw2, (D_out, H), dtype=jnp.float32) * 0.05  # Linear(H, D_out) — unused in forward
    b_out = jax.random.normal(kb2, (D_out,), dtype=jnp.float32) * 0.05    # unused in forward

    # One-time transpose at parameter-load time (not per call).
    w_in_t = prepare_params(w_in)

    y = topicnet3_forward(x, w_in_t)
    y = jax.block_until_ready(y)

    y_ref = topicnet3_reference(x, w_in)
    assert y.shape == (1, H)
    assert jnp.allclose(y, y_ref, atol=1e-4, rtol=1e-4), "mismatch vs reference"

    print("KERNEL_OK")
</pallas_src>

<mosaic_0001>
module attributes {stable_mosaic.version = 11 : i64} {
  func.func @topicnet3_kernel(%arg0: memref<8x128xf32, #tpu.memory_space<vmem>>, %arg1: memref<128x256xf32, #tpu.memory_space<vmem>>, %arg2: memref<1x256xf32, #tpu.memory_space<vmem>>) attributes {dimension_semantics = [], scalar_prefetch = 0 : i64, scratch_operands = 0 : i64, tpu.core_type = #tpu.core_type<tc>} {
    %c0 = arith.constant 0 : index
    %c0_0 = arith.constant 0 : index
    %0 = vector.load %arg0[%c0, %c0_0] : memref<8x128xf32, #tpu.memory_space<vmem>>, vector<8x128xf32>
    %c0_1 = arith.constant 0 : index
    %c0_2 = arith.constant 0 : index
    %1 = vector.load %arg1[%c0_1, %c0_2] : memref<128x256xf32, #tpu.memory_space<vmem>>, vector<128x256xf32>
    %cst = arith.constant dense<0.000000e+00> : vector<8x256xf32>
    %2 = tpu.matmul %0, %1, %cst {dimension_numbers = #tpu.dot_dimension_numbers<[1], [0], [0], [1], [0, 0, 1, 1], [], []>} : vector<8x128xf32>, vector<128x256xf32>, vector<8x256xf32> -> vector<8x256xf32>
    %cst_3 = arith.constant dense<0xFF800000> : vector<256xf32>
    %3 = vector.multi_reduction <maximumf>, %2, %cst_3 [0] : vector<8x256xf32> to vector<256xf32>
    %4 = vector.shape_cast %3 : vector<256xf32> to vector<1x256xf32>
    %cst_4 = arith.constant 0.000000e+00 : f32
    %5 = vector.broadcast %cst_4 : f32 to vector<1x256xf32>
    %6 = arith.maximumf %4, %5 : vector<1x256xf32>
    %c0_5 = arith.constant 0 : index
    %c0_6 = arith.constant 0 : index
    %7 = vector.load %arg2[%c0_5, %c0_6] : memref<1x256xf32, #tpu.memory_space<vmem>>, vector<1x256xf32>
    tpu.vector_store %arg2[%c0_5, %c0_6], %6 {strides = array<i32>} : memref<1x256xf32, #tpu.memory_space<vmem>>, vector<1x256xf32>,
    return
  }
}

</mosaic_0001>

<llo_original>
// kernel: tpu_custom_call.1
$region0: #{tpu_custom_call.1}
  #allocation0 [shape = 'u32[]', space=smem, size = 0x4, offset = 0x4, fixed_abs, tag = 'smem constant byte address 0x4 - core index']
  #allocation1 [shape = 'u32[144,128]{1,0:T(1,128)}', space=vmem, size = 0x12000, scoped, tag = 'internal scratch']
  %s0 = inlined_call_operand.hbm [shape: f32[8,128], index: 0, kind: input, shape index: {}]
  %s1 = inlined_call_operand.hbm [shape: f32[128,256], index: 1, kind: input, shape index: {}]
  %s2 = inlined_call_operand.hbm [shape: f32[1,256], index: 2, kind: output, shape index: {}]
  %s3 = sld [smem:[#allocation0]]
  $region26: #{tpu_custom_call.1} parent=0
    _
  %s5 = ssub.s32 1, %s3
  %s6 = scalar_select 0, %s5, %s3
  $region1: #{tpu_custom_call.1} parent=0
    #allocation2 [shape = 'u8[4096]{0}', space=vmem, size = 0x1000, scoped, tag = 'input window, operand 0, single buffered']
    #allocation3 [shape = 's32[1]{0}', space=sflag, size = 0x4, scoped, tag = 'scoped memory for tpu_custom_call.1']
    #allocation4 [shape = 's32[1]{0}', space=sflag, size = 0x4, scoped, tag = 'scoped memory for tpu_custom_call.1']
    #allocation5 [shape = 'u8[131072]{0}', space=vmem, size = 0x20000, scoped, tag = 'input window, operand 1, single buffered']
    #allocation6 [shape = 's32[1]{0}', space=sflag, size = 0x4, scoped, tag = 'scoped memory for tpu_custom_call.1']
    #allocation7 [shape = 'u8[1024]{0}', space=vmem, size = 0x400, scoped, tag = 'output window, operand 0, single buffered']
    %7 = vsyncpa [#allocation3], 0
    %8 = vsyncpa [#allocation6], 0
    %9 = vsyncpa [#allocation4], 0
    // Predicated region
    $region2: #{tpu_custom_call.1} parent=1 // pred_check
      _
    $region3: #{tpu_custom_call.1} parent=1 // pred_check_branch
      %11 = sbr.rel (0) target = $region5
    $region4: #{tpu_custom_call.1} parent=1 // pred_region
      %s13 = ssub.s32 128, 128
      %14 = vsyncadd [#allocation3], %s13
      %s16 = sshll.u32 [#allocation2], 4
      %s17 = int_to_ptr.vmem [resolvable:$true] %s16
      %19 = dma.hbm_to_vmem [thread:$0]  %s0, 128, %s17, [#allocation3]
    $region5: #{tpu_custom_call.1} parent=1 // pred_fallthru
      _
    // Predicated region
    $region6: #{tpu_custom_call.1} parent=1 // pred_check
      _
    $region7: #{tpu_custom_call.1} parent=1 // pred_check_branch
      %21 = sbr.rel (0) target = $region9
    $region8: #{tpu_custom_call.1} parent=1 // pred_region
      %s23 = ssub.s32 4096, 4096
      %24 = vsyncadd [#allocation6], %s23
      %s25 = sshll.u32 [#allocation5], 4
      %s26 = int_to_ptr.vmem [resolvable:$true] %s25
      %31 = dma.hbm_to_vmem [thread:$0]  %s1, 4096, %s26, [#allocation6], 256, 256, 16
    $region9: #{tpu_custom_call.1} parent=1 // pred_fallthru
      _
    // Predicated region
    $region10: #{tpu_custom_call.1} parent=1 // pred_check
      _
    $region11: #{tpu_custom_call.1} parent=1 // pred_check_branch
      %33 = sbr.rel (0) target = $region13
    $region12: #{tpu_custom_call.1} parent=1 // pred_region
      %34 = dma.done [#allocation3], 128
    $region13: #{tpu_custom_call.1} parent=1 // pred_fallthru
      _
    // Predicated region
    $region14: #{tpu_custom_call.1} parent=1 // pred_check
      _
    $region15: #{tpu_custom_call.1} parent=1 // pred_check_branch
      %36 = sbr.rel (0) target = $region17
    $region16: #{tpu_custom_call.1} parent=1 // pred_region
      %37 = dma.done [#allocation6], 4096
    $region17: #{tpu_custom_call.1} parent=1 // pred_fallthru
      _
    %v38 = vld [vmem:[#allocation2] sm:$0xff]
    %v39 = vld [vmem:[#allocation5] sm:$0xff]
    %v40 = vld [vmem:[#allocation5 + $0x8] sm:$0xff]
    %v41 = vld [vmem:[#allocation5 + $0x10] sm:$0xff]
    %v42 = vld [vmem:[#allocation5 + $0x18] sm:$0xff]
    %v43 = vld [vmem:[#allocation5 + $0x20] sm:$0xff]
    %v44 = vld [vmem:[#allocation5 + $0x28] sm:$0xff]
    %v45 = vld [vmem:[#allocation5 + $0x30] sm:$0xff]
    %v46 = vld [vmem:[#allocation5 + $0x38] sm:$0xff]
    %v47 = vld [vmem:[#allocation5 + $0x40] sm:$0xff]
    %v48 = vld [vmem:[#allocation5 + $0x48] sm:$0xff]
    %v49 = vld [vmem:[#allocation5 + $0x50] sm:$0xff]
    %v50 = vld [vmem:[#allocation5 + $0x58] sm:$0xff]
    %v51 = vld [vmem:[#allocation5 + $0x60] sm:$0xff]
    %v52 = vld [vmem:[#allocation5 + $0x68] sm:$0xff]
    %v53 = vld [vmem:[#allocation5 + $0x70] sm:$0xff]
    %v54 = vld [vmem:[#allocation5 + $0x78] sm:$0xff]
    %v55 = vld [vmem:[#allocation5 + $0x80] sm:$0xff]
    %v56 = vld [vmem:[#allocation5 + $0x88] sm:$0xff]
    %v57 = vld [vmem:[#allocation5 + $0x90] sm:$0xff]
    %v58 = vld [vmem:[#allocation5 + $0x98] sm:$0xff]
    %v59 = vld [vmem:[#allocation5 + $0xa0] sm:$0xff]
    %v60 = vld [vmem:[#allocation5 + $0xa8] sm:$0xff]
    %v61 = vld [vmem:[#allocation5 + $0xb0] sm:$0xff]
    %v62 = vld [vmem:[#allocation5 + $0xb8] sm:$0xff]
    %v63 = vld [vmem:[#allocation5 + $0xc0] sm:$0xff]
    %v64 = vld [vmem:[#allocation5 + $0xc8] sm:$0xff]
    %v65 = vld [vmem:[#allocation5 + $0xd0] sm:$0xff]
    %v66 = vld [vmem:[#allocation5 + $0xd8] sm:$0xff]
    %v67 = vld [vmem:[#allocation5 + $0xe0] sm:$0xff]
    %v68 = vld [vmem:[#allocation5 + $0xe8] sm:$0xff]
    %v69 = vld [vmem:[#allocation5 + $0xf0] sm:$0xff]
    %v70 = vld [vmem:[#allocation5 + $0xf8] sm:$0xff]
    %71 = vmatprep.subr.mxu0 %v40
    %72 = vmatpush1.msra.mxu0 %v39
    %73 = vmatprep.subr.mxu0 %v42
    %74 = vmatpush1.msra.mxu0 %v41
    %75 = vmatprep.subr.mxu0 %v44
    %76 = vmatpush1.msra.mxu0 %v43
    %77 = vmatprep.subr.mxu0 %v46
    %78 = vmatpush1.msra.mxu0 %v45
    %79 = vmatprep.subr.mxu0 %v48
    %80 = vmatpush1.msra.mxu0 %v47
    %81 = vmatprep.subr.mxu0 %v50
    %82 = vmatpush1.msra.mxu0 %v49
    %83 = vmatprep.subr.mxu0 %v52
    %84 = vmatpush1.msra.mxu0 %v51
    %85 = vmatprep.subr.mxu0 %v54
    %86 = vmatpush1.msra.mxu0 %v53
    %87 = vmatprep.subr.mxu0 %v56
    %88 = vmatpush1.msra.mxu0 %v55
    %89 = vmatprep.subr.mxu0 %v58
    %90 = vmatpush1.msra.mxu0 %v57
    %91 = vmatprep.subr.mxu0 %v60
    %92 = vmatpush1.msra.mxu0 %v59
    %93 = vmatprep.subr.mxu0 %v62
    %94 = vmatpush1.msra.mxu0 %v61
    %95 = vmatprep.subr.mxu0 %v64
    %96 = vmatpush1.msra.mxu0 %v63
    %97 = vmatprep.subr.mxu0 %v66
    %98 = vmatpush1.msra.mxu0 %v65
    %99 = vmatprep.subr.mxu0 %v68
    %100 = vmatpush1.msra.mxu0 %v67
    %101 = vmatprep.subr.mxu0 %v70
    %102 = vmatpush1.msra.mxu0 %v69
    %103 = vmatprep.subr.mxu0 0.0
    %104 = vmatpush1.msra.mxu0 0.0
    %105 = vmatprep.subr.mxu0 0.0
    %106 = vmatpush1.msra.mxu0 0.0
    %107 = vmatprep.subr.mxu0 0.0
    %108 = vmatpush1.msra.mxu0 0.0
    %109 = vmatprep.subr.mxu0 0.0
    %110 = vmatpush1.msra.mxu0 0.0
    %111 = vmatprep.subr.mxu0 0.0
    %112 = vmatpush1.msra.mxu0 0.0
    %113 = vmatprep.subr.mxu0 0.0
    %114 = vmatpush1.msra.mxu0 0.0
    %115 = vmatprep.subr.mxu0 0.0
    %116 = vmatpush1.msra.mxu0 0.0
    %117 = vmatprep.subr.mxu0 0.0
    %118 = vmatpush1.msra.mxu0 0.0
    %119 = vmatprep.subr.mxu0 0.0
    %120 = vmatpush1.msra.mxu0 0.0
    %121 = vmatprep.subr.mxu0 0.0
    %122 = vmatpush1.msra.mxu0 0.0
    %123 = vmatprep.subr.mxu0 0.0
    %124 = vmatpush1.msra.mxu0 0.0
    %125 = vmatprep.subr.mxu0 0.0
    %126 = vmatpush1.msra.mxu0 0.0
    %127 = vmatprep.subr.mxu0 0.0
    %128 = vmatpush1.msra.mxu0 0.0
    %129 = vmatprep.subr.mxu0 0.0
    %130 = vmatpush1.msra.mxu0 0.0
    %131 = vmatprep.subr.mxu0 0.0
    %132 = vmatpush1.msra.mxu0 0.0
    %133 = vmatprep.subr.mxu0 0.0
    %134 = vmatpush1.msra.mxu0 0.0
    %135 = vmatprep.mubr.f32.mxu0 0.0
    %136 = vmatmul.mubr.f32.gmra.mrb[0].mxu0 %v38
    %v137 = vpop.f32.mrb[0].mxu0
    %v138 = vadd.f32 0.0, %v137
    %v139 = vpop.f32.mrb[0].mxu0
    %v140 = vadd.f32 0.0, %v139
    %141 = vdwg.mxu0
    %v142 = vrot.slane %v138, 4
    %v143 = vmax.f32 %v138, %v142
    %v144 = vrot.slane %v143, 2
    %v145 = vmax.f32 %v143, %v144
    %v146 = vrot.slane %v145, 1
    %v147 = vmax.f32 %v145, %v146
    %v148 = vrot.slane %v140, 4
    %v149 = vmax.f32 %v140, %v148
    %v150 = vrot.slane %v149, 2
    %v151 = vmax.f32 %v149, %v150
    %v152 = vrot.slane %v151, 1
    %v153 = vmax.f32 %v151, %v152
    %v154 = vmax.f32 %v147, 0.0
    %v155 = vmax.f32 %v153, 0.0
    %v158 = vcombine.low %v154, %v155
    %v160 = vunpack.c.l.s4 1966171168
    %v161 = vunpack.c.0.s8 %v160
    %v162 = vlaneseq
    %v163 = vshrl.u32 %v162, 7
    %v164 = vsub.s32 %v161, %v163
    %v165 = vrot.slane %v158, %v164
    %v167 = vunpack.c.l.s4 1966171168
    %v168 = vunpack.c.0.s8 %v167
    %v169 = vlaneseq
    %v170 = vshrl.u32 %v169, 7
    %v171 = vsub.s32 %v168, %v170
    %v172 = vrot.slane %v165, %v171
    %v174 = vlaneseq
    %vm175 = vcmp.ge.s32.totalorder %v174, 0
    %vm176 = vcmp.lt.s32.totalorder %v174, 256
    %vm177 = vmand %vm175, %vm176
    %178 = vst.msk [vmem:[#allocation7] sm:$0x3] %vm177, %v172
    // Predicated region
    $region18: #{tpu_custom_call.1} parent=1 // pred_check
      _
    $region19: #{tpu_custom_call.1} parent=1 // pred_check_branch
      %180 = sbr.rel (0) target = $region21
    $region20: #{tpu_custom_call.1} parent=1 // pred_region
      %s182 = ssub.s32 32, 32
      %183 = vsyncadd [#allocation4], %s182
      %s185 = sshll.u32 [#allocation7], 4
      %s186 = int_to_ptr.vmem [resolvable:$true] %s185
      %188 = dma.vmem_to_hbm [thread:$0]  %s186, 32, %s2, [#allocation4]
    $region21: #{tpu_custom_call.1} parent=1 // pred_fallthru
      _
    // Predicated region
    $region22: #{tpu_custom_call.1} parent=1 // pred_check
      _
    $region23: #{tpu_custom_call.1} parent=1 // pred_check_branch
      %190 = sbr.rel (0) target = $region25
    $region24: #{tpu_custom_call.1} parent=1 // pred_region
      %191 = dma.done [#allocation4], 32
    $region25: #{tpu_custom_call.1} parent=1 // pred_fallthru
      _
    %192 = vsyncpa [#allocation3], 1
    %193 = vsyncpa [#allocation6], 1
    %194 = vsyncpa [#allocation4], 1

</llo_original>
